<compile_context>
chip_gen: v5e
topology: v5e:2x2
jax: 0.10.0
libtpu: 0.0.40
codegen_flags: <defaults>
</compile_context>

<pallas_src>
import functools

import jax
import jax.numpy as jnp
from jax.experimental import pallas as pl
from jax.experimental.pallas import tpu as pltpu


# ---- static "module config" (the acts list from __init__) --------------------
# Rs (normalized, scalar fields l=0): [(2, 0, 0), (1, 0, 0), (1, 0, 0)]
# acts:                               [(2, relu), (1, tanh),  (1, sigmoid)]
SEGMENT_MULS = (2, 1, 1)                              # multiplicities, sum = channels
SEGMENT_ACTS = (jax.nn.relu, jnp.tanh, jax.nn.sigmoid)   # reference only
NUM_CHANNELS = sum(SEGMENT_MULS)
# Cumulative upper channel boundary of each segment: (2, 3, 4).
SEGMENT_BOUNDS = tuple(sum(SEGMENT_MULS[: i + 1]) for i in range(len(SEGMENT_MULS)))
assert SEGMENT_BOUNDS[-1] == NUM_CHANNELS
# TODO(synk): __init__ parity bookkeeping (Rs_out) is metadata only, not forward math.

LANES = 512                                           # lane-dense width (multiple of 128)
assert LANES % NUM_CHANNELS == 0                      # channel == lane % C exact

# bf16 VPU/EUP exists on v6e/v7x; older generations upcast to f32 for math.
try:
    _DEVICE_KIND = jax.devices()[0].device_kind.lower()
except Exception:  # pragma: no cover - defensive
    _DEVICE_KIND = ""
_HAS_BF16_VPU = not any(s in _DEVICE_KIND for s in ("v2", "v3", "v4", "v5"))


def _math_dtype(dtype):
    dtype = jnp.dtype(dtype)
    if dtype == jnp.dtype(jnp.bfloat16) and _HAS_BF16_VPU:
        return jnp.bfloat16
    return jnp.float32


def _round_up(a, b):
    return ((a + b - 1) // b) * b


def _activation_kernel(x_ref, o_ref, *, math_dtype):
    x = x_ref[...]                                    # (tr, LANES)
    xm = x.astype(math_dtype)
    ch = jax.lax.broadcasted_iota(jnp.int32, x.shape, dimension=x.ndim - 1) % NUM_CHANNELS
    half = jnp.asarray(0.5, math_dtype)
    one = jnp.asarray(1.0, math_dtype)
    zero = jnp.asarray(0.0, math_dtype)
    # Segments: ch < 2 -> relu, ch == 2 -> tanh, ch == 3 -> sigmoid.
    # One shared EUP op: tanh of a lane-selected argument; sigmoid recovered as
    # 0.5*(tanh(0.5*x)+1).  relu lanes use the VPU (jnp.maximum) only.
    t = jnp.tanh(jnp.where(ch >= SEGMENT_BOUNDS[1], half * xm, xm))
    out = jnp.where(
        ch < SEGMENT_BOUNDS[0], jnp.maximum(xm, zero),
        jnp.where(ch < SEGMENT_BOUNDS[1], t, half * (t + one)))
    o_ref[...] = out.astype(o_ref.dtype)


@functools.partial(jax.jit, static_argnames=("tile_rows",))
def activation_forward(features, tile_rows=2048):
    """Per-segment activation over the last (channel) axis.

    features: [..., NUM_CHANNELS] (dim=-1 in the PyTorch forward).
    Returns the same shape and dtype.
    """
    orig_shape = features.shape
    assert orig_shape[-1] == NUM_CHANNELS, (
        f"expected {NUM_CHANNELS} channels, got {orig_shape[-1]}")

    dtype = jnp.dtype(features.dtype)
    itemsize = dtype.itemsize
    sub = max(8, 32 // itemsize)                      # sublane tile: 8 f32 / 16 bf16 / 32 i8

    # ---- lane-dense re-layout: flatten and view as (rows, LANES) -------------
    flat = features.reshape(-1)
    n = flat.shape[0]
    padded_n = _round_up(n, LANES)                    # pad < LANES elements (ragged only)
    if padded_n != n:
        flat = jnp.pad(flat, (0, padded_n - n))
    rows = padded_n // LANES
    x2d = flat.reshape(rows, LANES)

    # ---- tile-rows selection --------------------------------------------------
    tr = max(sub, (int(tile_rows) // sub) * sub)
    # On large inputs, cap the tile so the parallel grid has >=8 steps
    # (>=2 per TensorCore on 2-TC chips) without dropping below 256-row tiles.
    if rows > 8 * max(256, sub):
        tr = min(tr, max(256, _round_up(pl.cdiv(rows, 8), sub)))
    if rows <= tr:
        tr = rows                                     # single full block (block == array dim)
    nblocks = pl.cdiv(rows, tr)                       # ragged last block is masked by Pallas

    out2d = pl.pallas_call(
        functools.partial(_activation_kernel, math_dtype=_math_dtype(dtype)),
        out_shape=jax.ShapeDtypeStruct((rows, LANES), dtype),
        grid=(nblocks,),
        in_specs=[pl.BlockSpec((tr, LANES), lambda i: (i, 0))],
        out_specs=pl.BlockSpec((tr, LANES), lambda i: (i, 0)),
        compiler_params=pltpu.CompilerParams(
            dimension_semantics=("parallel",),        # shards across TCs on v7x
            vmem_limit_bytes=32 * 1024 * 1024,        # safe on 64 MiB v7x VMEM
        ),
    )(x2d)

    out_flat = out2d.reshape(-1)
    if padded_n != n:
        out_flat = out_flat[:n]
    return out_flat.reshape(orig_shape)


def _reference_forward(features):
    """Pure-JAX reference mirroring the PyTorch narrow/cat loop."""
    outs = []
    idx = 0
    for mul, act in zip(SEGMENT_MULS, SEGMENT_ACTS):
        outs.append(act(features[..., idx:idx + mul]).astype(features.dtype))
        idx += mul
    return jnp.concatenate(outs, axis=-1)


if __name__ == "__main__":
    key = jax.random.PRNGKey(0)
    # batch=2, spatial=16, channels=4  (channels last = dim=-1)
    x = jax.random.normal(key, (2, 16, NUM_CHANNELS), dtype=jnp.float32)

    out = jax.block_until_ready(activation_forward(x))
    ref = _reference_forward(x)
    assert out.shape == x.shape and out.dtype == x.dtype
    assert jnp.allclose(out, ref, atol=1e-5, rtol=1e-5), "mismatch vs reference"

    # Non-divisible shape: exercises the <512-element pad + slice path.
    x2 = jax.random.normal(jax.random.PRNGKey(1), (3, 7, 13, NUM_CHANNELS), jnp.float32)
    out2 = jax.block_until_ready(activation_forward(x2))
    assert jnp.allclose(out2, _reference_forward(x2), atol=1e-5, rtol=1e-5)

    # Exact-fit multi-row shape: exercises the no-pad, lane-dense path.
    x3 = jax.random.normal(jax.random.PRNGKey(2), (4, 32, 16, NUM_CHANNELS), jnp.float32)
    out3 = jax.block_until_ready(activation_forward(x3))
    assert jnp.allclose(out3, _reference_forward(x3), atol=1e-5, rtol=1e-5)

    print("KERNEL_OK")
</pallas_src>

<mosaic_0001>
module attributes {stable_mosaic.version = 11 : i64} {
  func.func @_activation_kernel(%arg0: i32, %arg1: memref<1x512xf32, #tpu.memory_space<vmem>>, %arg2: memref<1x512xf32, #tpu.memory_space<vmem>>) attributes {dimension_semantics = [#tpu.dimension_semantics<parallel>], iteration_bounds = array<i64: 1>, scalar_prefetch = 0 : i64, scratch_operands = 0 : i64, tpu.core_type = #tpu.core_type<tc>, window_params = [{transform_indices = @transform_0, window_bounds = array<i64: 1, 512>}, {transform_indices = @transform_1, window_bounds = array<i64: 1, 512>}]} {
    %c0 = arith.constant 0 : index
    %c0_0 = arith.constant 0 : index
    %0 = vector.load %arg1[%c0, %c0_0] : memref<1x512xf32, #tpu.memory_space<vmem>>, vector<1x512xf32>
    %1 = tpu.iota {dimensions = array<i32: 1>} : vector<1x512xi32>
    %c4_i32 = arith.constant 4 : i32
    %c0_i32 = arith.constant 0 : i32
    %2 = arith.cmpi eq, %c4_i32, %c0_i32 : i32
    %c1_i32 = arith.constant 1 : i32
    %3 = arith.select %2, %c1_i32, %c4_i32 : i32
    %4 = vector.broadcast %3 : i32 to vector<1x512xi32>
    %5 = arith.remsi %1, %4 : vector<1x512xi32>
    %c0_i32_1 = arith.constant 0 : i32
    %6 = vector.broadcast %c0_i32_1 : i32 to vector<1x512xi32>
    %7 = arith.cmpi ne, %5, %6 : vector<1x512xi32>
    %c0_i32_2 = arith.constant 0 : i32
    %8 = vector.broadcast %c0_i32_2 : i32 to vector<1x512xi32>
    %9 = arith.cmpi slt, %5, %8 : vector<1x512xi32>
    %c0_i32_3 = arith.constant 0 : i32
    %10 = arith.cmpi slt, %3, %c0_i32_3 : i32
    %11 = vector.broadcast %10 : i1 to vector<1x512xi1>
    %12 = vector.broadcast %11 : vector<1x512xi1> to vector<1x512xi1>
    %13 = arith.xori %9, %12 : vector<1x512xi1>
    %14 = arith.andi %13, %7 : vector<1x512xi1>
    %15 = vector.broadcast %3 : i32 to vector<1x512xi32>
    %16 = arith.addi %5, %15 : vector<1x512xi32>
    %17 = arith.select %14, %16, %5 : vector<1x512xi1>, vector<1x512xi32>
    %c3_i32 = arith.constant 3 : i32
    %18 = vector.broadcast %c3_i32 : i32 to vector<1x512xi32>
    %19 = arith.cmpi sge, %17, %18 : vector<1x512xi32>
    %cst = arith.constant 5.000000e-01 : f32
    %20 = vector.broadcast %cst : f32 to vector<1x512xf32>
    %21 = arith.mulf %20, %0 : vector<1x512xf32>
    %22 = arith.select %19, %21, %0 : vector<1x512xi1>, vector<1x512xf32>
    %23 = math.tanh %22 : vector<1x512xf32>
    %c2_i32 = arith.constant 2 : i32
    %24 = vector.broadcast %c2_i32 : i32 to vector<1x512xi32>
    %25 = arith.cmpi slt, %17, %24 : vector<1x512xi32>
    %cst_4 = arith.constant 0.000000e+00 : f32
    %26 = vector.broadcast %cst_4 : f32 to vector<1x512xf32>
    %27 = arith.maximumf %0, %26 : vector<1x512xf32>
    %c3_i32_5 = arith.constant 3 : i32
    %28 = vector.broadcast %c3_i32_5 : i32 to vector<1x512xi32>
    %29 = arith.cmpi slt, %17, %28 : vector<1x512xi32>
    %cst_6 = arith.constant 1.000000e+00 : f32
    %30 = vector.broadcast %cst_6 : f32 to vector<1x512xf32>
    %31 = arith.addf %23, %30 : vector<1x512xf32>
    %cst_7 = arith.constant 5.000000e-01 : f32
    %32 = vector.broadcast %cst_7 : f32 to vector<1x512xf32>
    %33 = arith.mulf %32, %31 : vector<1x512xf32>
    %34 = arith.select %29, %23, %33 : vector<1x512xi1>, vector<1x512xf32>
    %35 = arith.select %25, %27, %34 : vector<1x512xi1>, vector<1x512xf32>
    %c0_8 = arith.constant 0 : index
    %c0_9 = arith.constant 0 : index
    %36 = vector.load %arg2[%c0_8, %c0_9] : memref<1x512xf32, #tpu.memory_space<vmem>>, vector<1x512xf32>
    tpu.vector_store %arg2[%c0_8, %c0_9], %35 {strides = array<i32>} : memref<1x512xf32, #tpu.memory_space<vmem>>, vector<1x512xf32>,
    return
  }
  func.func @transform_0(%arg0: i32) -> (i32, i32) {
    %c0_i32 = arith.constant 0 : i32
    %c0_i32_0 = arith.constant 0 : i32
    return %arg0, %c0_i32 : i32, i32
  }
  func.func @transform_1(%arg0: i32) -> (i32, i32) {
    %c0_i32 = arith.constant 0 : i32
    %c0_i32_0 = arith.constant 0 : i32
    return %arg0, %c0_i32 : i32, i32
  }
}

</mosaic_0001>

<llo_original>
// kernel: activation_forward.1
$region0: #{activation_forward.1}
  #allocation0 [shape = 'u32[]', space=smem, size = 0x4, offset = 0x4, fixed_abs, tag = 'smem constant byte address 0x4 - core index']
  #allocation1 [shape = 'u32[72,128]{1,0:T(1,128)}', space=vmem, size = 0x9000, scoped, tag = 'internal scratch']
  %s0 = inlined_call_operand.vmem [shape: f32[1,512], index: 0, kind: input, shape index: {}]
  %s1 = inlined_call_operand.vmem [shape: f32[1,512], index: 1, kind: output, shape index: {}]
  %s2 = sld [smem:[#allocation0]]
  $region14: #{activation_forward.1} parent=0
    _
  %s4 = ssub.s32 1, %s2
  %s5 = scalar_select 0, %s4, %s2
  // Predicated region
  $region2: #{activation_forward.1} parent=0 // pred_check
    _
  $region3: #{activation_forward.1} parent=0 // pred_check_branch
    %7 = sbr.rel (0) target = $region5
  $region4: #{activation_forward.1} parent=0 // pred_region
    _
  $region5: #{activation_forward.1} parent=0 // pred_fallthru
    _
  %v8 = vld [vmem:[%s0] sm:$0xf]
  %v9 = vlaneseq
  %v10 = vand.u32 %v9, 127
  %v11 = vadd.s32 %v10, 128
  %v12 = vadd.s32 %v10, 256
  %v13 = vadd.s32 %v10, 384
  %vm14 = vcmp.lt.s32.totalorder %v10, 0
  %v15 = vsub.s32 0, %v10
  %v16 = vsel %vm14, %v15, %v10
  %v17 = vshrl.u32 %v16, 2
  %v18 = vand.u32 %v16, 3
  %v19 = vsub.s32 0, %v18
  %v20 = vsel %vm14, %v19, %v18
  %vm21 = vcmp.lt.s32.totalorder %v11, 0
  %v22 = vsub.s32 0, %v11
  %v23 = vsel %vm21, %v22, %v11
  %v24 = vshrl.u32 %v23, 2
  %v25 = vand.u32 %v23, 3
  %v26 = vsub.s32 0, %v25
  %v27 = vsel %vm21, %v26, %v25
  %vm28 = vcmp.lt.s32.totalorder %v12, 0
  %v29 = vsub.s32 0, %v12
  %v30 = vsel %vm28, %v29, %v12
  %v31 = vshrl.u32 %v30, 2
  %v32 = vand.u32 %v30, 3
  %v33 = vsub.s32 0, %v32
  %v34 = vsel %vm28, %v33, %v32
  %vm35 = vcmp.lt.s32.totalorder %v13, 0
  %v36 = vsub.s32 0, %v13
  %v37 = vsel %vm35, %v36, %v13
  %v38 = vshrl.u32 %v37, 2
  %v39 = vand.u32 %v37, 3
  %v40 = vsub.s32 0, %v39
  %v41 = vsel %vm35, %v40, %v39
  %vm42 = vcmp.ne.s32.totalorder %v20, 0
  %vm43 = vcmp.ne.s32.totalorder %v27, 0
  %vm44 = vcmp.ne.s32.totalorder %v34, 0
  %vm45 = vcmp.ne.s32.totalorder %v41, 0
  %vm46 = vcmp.lt.s32.totalorder %v20, 0
  %vm47 = vcmp.lt.s32.totalorder %v27, 0
  %vm48 = vcmp.lt.s32.totalorder %v34, 0
  %vm49 = vcmp.lt.s32.totalorder %v41, 0
  %vm50 = vmand %vm46, %vm42
  %vm51 = vmand %vm47, %vm43
  %vm52 = vmand %vm48, %vm44
  %vm53 = vmand %vm49, %vm45
  %v54 = vadd.s32 %v20, 4
  %v55 = vadd.s32 %v27, 4
  %v56 = vadd.s32 %v34, 4
  %v57 = vadd.s32 %v41, 4
  %v58 = vsel %vm50, %v54, %v20
  %v59 = vsel %vm51, %v55, %v27
  %v60 = vsel %vm52, %v56, %v34
  %v61 = vsel %vm53, %v57, %v41
  %vm62 = vcmp.ge.s32.totalorder %v58, 3
  %vm63 = vcmp.ge.s32.totalorder %v59, 3
  %vm64 = vcmp.ge.s32.totalorder %v60, 3
  %vm65 = vcmp.ge.s32.totalorder %v61, 3
  %v66 = vmul.f32 %v8, 0.5
  %v68 = vperm.slane %v66, 0
  %v69 = vperm.slane %v66, 1
  %v70 = vperm.slane %v66, 2
  %v71 = vperm.slane %v66, 3
  %v77 = vperm.slane %v8, 0
  %v78 = vperm.slane %v8, 1
  %v79 = vperm.slane %v8, 2
  %v80 = vperm.slane %v8, 3
  %v85 = vsel %vm62, %v68, %v77
  %v86 = vsel %vm63, %v69, %v78
  %v87 = vsel %vm64, %v70, %v79
  %v88 = vsel %vm65, %v71, %v80
  %v89 = vtanh.pop %v85
  %v90 = vtanh.pop %v86
  %v91 = vtanh.pop %v87
  %v92 = vtanh.pop %v88
  %vm93 = vcmp.lt.s32.totalorder %v58, 2
  %vm94 = vcmp.lt.s32.totalorder %v59, 2
  %vm95 = vcmp.lt.s32.totalorder %v60, 2
  %vm96 = vcmp.lt.s32.totalorder %v61, 2
  %v97 = vmax.f32 %v8, 0.0
  %vm98 = vcmp.lt.s32.totalorder %v58, 3
  %vm99 = vcmp.lt.s32.totalorder %v59, 3
  %vm100 = vcmp.lt.s32.totalorder %v60, 3
  %vm101 = vcmp.lt.s32.totalorder %v61, 3
  %v102 = vadd.f32 %v89, 1.0
  %v103 = vadd.f32 %v90, 1.0
  %v104 = vadd.f32 %v91, 1.0
  %v105 = vadd.f32 %v92, 1.0
  %v106 = vmul.f32 %v102, 0.5
  %v107 = vmul.f32 %v103, 0.5
  %v108 = vmul.f32 %v104, 0.5
  %v109 = vmul.f32 %v105, 0.5
  %v110 = vsel %vm98, %v89, %v106
  %v111 = vsel %vm99, %v90, %v107
  %v112 = vsel %vm100, %v91, %v108
  %v113 = vsel %vm101, %v92, %v109
  %v115 = vperm.slane %v97, 0
  %v116 = vperm.slane %v97, 1
  %v117 = vperm.slane %v97, 2
  %v118 = vperm.slane %v97, 3
  %v123 = vsel %vm93, %v115, %v110
  %v124 = vsel %vm94, %v116, %v111
  %v125 = vsel %vm95, %v117, %v112
  %v126 = vsel %vm96, %v118, %v113
  %v131 = vrot.slane %v124, 7
  %v132 = vrot.slane %v125, 6
  %v133 = vrot.slane %v126, 5
  %vm134 = vcmask 1040384
  %v135 = vsel %vm134, %v123, %v131
  %vm136 = vcmask 1042434
  %v137 = vsel %vm136, %v132, %v133
  %vm138 = vcmask 1041408
  %v139 = vsel %vm138, %v135, %v137
  %v141 = vlaneseq
  %vm142 = vcmp.ge.s32.totalorder %v141, 0
  %vm143 = vcmp.lt.s32.totalorder %v141, 512
  %vm144 = vmand %vm142, %vm143
  %145 = vst.msk [vmem:[%s1] sm:$0xf] %vm144, %v139
  // Predicated region
  $region6: #{activation_forward.1} parent=0 // pred_check
    _
  $region7: #{activation_forward.1} parent=0 // pred_check_branch
    %147 = sbr.rel (0) target = $region9
  $region8: #{activation_forward.1} parent=0 // pred_region
    _
  $region9: #{activation_forward.1} parent=0 // pred_fallthru
    _
  // Predicated region
  $region10: #{activation_forward.1} parent=0 // pred_check
    _
  $region11: #{activation_forward.1} parent=0 // pred_check_branch
    %149 = sbr.rel (0) target = $region13
  $region12: #{activation_forward.1} parent=0 // pred_region
    _
  $region13: #{activation_forward.1} parent=0 // pred_fallthru
    _

</llo_original>
